<compile_context>
chip_gen: v6e
topology: v6e:2x2x1
jax: 0.10.0
libtpu: 0.0.40
codegen_flags: <defaults>
</compile_context>

<pallas_src>
import functools

import jax
import jax.numpy as jnp
from jax import lax
from jax.experimental import pallas as pl
from jax.experimental.pallas import tpu as pltpu


def _round_up(x: int, m: int) -> int:
    return ((x + m - 1) // m) * m


def _linear_kernel_fused_out(x_ref, w_ref, b_ref, o_ref, *, compute_dtype):
    # x_ref: (tm, tk)   w_ref: (tn, tk)   b_ref: (1, tn)   o_ref: (tm, tn) f32
    # o_ref's block index (i, j) is K-invariant -> the tile stays resident in
    # VMEM across all K steps; accumulate into it directly (no scratch, no
    # epilogue copy; bias added exactly once at k == 0).
    k = pl.program_id(2)

    @pl.when(k == 0)
    def _():
        o_ref[...] = jnp.broadcast_to(b_ref[...], o_ref.shape)

    # Contract the LAST dim of both operands: (tm, tk) x (tn, tk) -> (tm, tn).
    # The MXU consumes the PyTorch (D_out, D_in) weight layout natively; no
    # in-kernel XLU transpose.  The f32 -> compute_dtype cast happens here on
    # the loaded VMEM block (no wrapper-side HBM pass).
    o_ref[...] += lax.dot_general(
        x_ref[...].astype(compute_dtype),
        w_ref[...].astype(compute_dtype),
        dimension_numbers=(((1,), (1,)), ((), ())),
        preferred_element_type=jnp.float32)


def _linear_kernel_scratch_acc(x_ref, w_ref, b_ref, o_ref, acc_ref, *,
                               compute_dtype):
    # Variant for non-f32 output dtypes: f32 scratch accumulator, cast at end.
    k = pl.program_id(2)

    @pl.when(k == 0)
    def _():
        acc_ref[...] = jnp.broadcast_to(b_ref[...], acc_ref.shape)

    acc_ref[...] += lax.dot_general(
        x_ref[...].astype(compute_dtype),
        w_ref[...].astype(compute_dtype),
        dimension_numbers=(((1,), (1,)), ((), ())),
        preferred_element_type=jnp.float32)

    @pl.when(k == pl.num_programs(2) - 1)
    def _():
        o_ref[...] = acc_ref[...].astype(o_ref.dtype)


def _maml_linear_pallas(x, weight, bias, *, compute_dtype=jnp.bfloat16,
                        tm=None, tn=None, tk=None):
    B, D_in = x.shape
    D_out, d_in_w = weight.shape
    assert d_in_w == D_in
    out_dtype = x.dtype
    compute_dtype = jnp.dtype(compute_dtype)
    in_itemsize = jnp.dtype(x.dtype).itemsize

    # ---- tile selection ---------------------------------------------------
    sub = max(8, 32 // in_itemsize)                 # sublane multiple (8 for f32)
    if tm is None:
        tm = min(256, _round_up(B, sub))            # small MAML batch: tm == Bp,
    if tk is None:                                  # so W is streamed exactly once
        tk = min(1024, _round_up(D_in, 128))
    if tn is None:
        tn = min(512, _round_up(D_out, 128))
    tm = max(sub, _round_up(min(tm, _round_up(B, sub)), sub))
    tk = max(128, _round_up(min(tk, _round_up(D_in, 128)), 128))
    tn = max(128, _round_up(min(tn, _round_up(D_out, 128)), 128))

    # v7x has 2 TensorCores: with a single M tile (typical small MAML batch),
    # split the N axis into >= 2 'parallel' tiles so both cores get work.
    # Harmless on single-core v5e/v6e.
    if _round_up(B, tm) // tm == 1 and D_out > 128:
        tn = min(tn, max(128, _round_up((D_out + 1) // 2, 128)))

    Bp = _round_up(B, tm)
    Kp = _round_up(D_in, tk)
    Np = _round_up(D_out, tn)

    # ---- padding (skipped entirely when already tile-aligned) --------------
    xp = x if (Bp == B and Kp == D_in) else jnp.pad(
        x, ((0, Bp - B), (0, Kp - D_in)))
    wp = weight if (Np == D_out and Kp == D_in) else jnp.pad(
        weight, ((0, Np - D_out), (0, Kp - D_in)))
    bvec = bias.astype(jnp.float32)
    bp = (bvec if Np == D_out else jnp.pad(bvec, (0, Np - D_out))).reshape(1, Np)

    grid = (Bp // tm, Np // tn, Kp // tk)

    in_specs = [
        pl.BlockSpec((tm, tk), lambda i, j, k: (i, k)),   # x tile
        pl.BlockSpec((tn, tk), lambda i, j, k: (j, k)),   # weight tile (PyTorch layout)
        pl.BlockSpec((1, tn), lambda i, j, k: (0, j)),    # bias tile
    ]
    out_spec = pl.BlockSpec((tm, tn), lambda i, j, k: (i, j))

    fused = jnp.dtype(out_dtype) == jnp.float32
    footprint = (2 * (tm * tk + tn * tk) * in_itemsize      # double-buffered inputs
                 + 2 * tn * 4                               # bias
                 + 2 * tm * tn * jnp.dtype(out_dtype).itemsize)  # output tiles
    if not fused:
        footprint += tm * tn * 4                            # f32 accumulator scratch
    vmem_limit = int(min(56 * 1024 * 1024, max(32 * 1024 * 1024, 2 * footprint)))

    compiler_params = pltpu.CompilerParams(
        dimension_semantics=("parallel", "parallel", "arbitrary"),
        vmem_limit_bytes=vmem_limit)

    if fused:
        kernel = functools.partial(_linear_kernel_fused_out,
                                   compute_dtype=compute_dtype)
        scratch_shapes = []
    else:
        kernel = functools.partial(_linear_kernel_scratch_acc,
                                   compute_dtype=compute_dtype)
        scratch_shapes = [pltpu.VMEM((tm, tn), jnp.float32)]

    yp = pl.pallas_call(
        kernel,
        out_shape=jax.ShapeDtypeStruct((Bp, Np), out_dtype),
        grid_spec=pltpu.PrefetchScalarGridSpec(
            num_scalar_prefetch=0,
            grid=grid,
            in_specs=in_specs,
            out_specs=out_spec,
            scratch_shapes=scratch_shapes),
        compiler_params=compiler_params,
    )(xp, wp, bp)

    if Bp == B and Np == D_out:
        return yp
    return yp[:B, :D_out]


def maml_layer_forward(x, weight, bias, *, compute_dtype=jnp.bfloat16,
                       force_pallas=False, tm=None, tn=None, tk=None):
    """y = x @ weight.T + bias (torch.nn.Linear semantics)."""
    B, _ = x.shape
    D_out = weight.shape[0]
    # Tiny problems: pallas_call launch + per-grid-step overhead dominates a
    # few hundred FLOPs; let XLA fuse the matmul instead.
    if not force_pallas and (B * D_out < 128 * 128):
        y = jnp.einsum("bk,ok->bo", x, weight,
                       preferred_element_type=jnp.float32) + bias
        return y.astype(x.dtype)
    return _maml_linear_pallas(x, weight, bias, compute_dtype=compute_dtype,
                               tm=tm, tn=tn, tk=tk)


def init_maml_layer_params(key, input_dim, output_dim):
    """Deterministic init mimicking nn.Linear defaults (Kaiming-uniform-ish)."""
    kw, kb = jax.random.split(key)
    bound = 1.0 / (input_dim ** 0.5)
    weight = jax.random.uniform(
        kw, (output_dim, input_dim), jnp.float32, minval=-bound, maxval=bound)
    bias = jax.random.uniform(
        kb, (output_dim,), jnp.float32, minval=-bound, maxval=bound)
    return weight, bias


if __name__ == "__main__":
    key = jax.random.PRNGKey(0)
    k1, k2, k3, k4, k5, k6 = jax.random.split(key, 6)

    # ---- case 1: module-sized toy shapes (single-tile grid, padded) --------
    batch, input_dim, output_dim = 8, 32, 16
    x = jax.random.normal(k1, (batch, input_dim), jnp.float32)
    weight, bias = init_maml_layer_params(k2, input_dim, output_dim)
    y_ref = jnp.einsum("bk,ok->bo", x, weight,
                       precision=lax.Precision.HIGHEST) + bias

    y_f32 = maml_layer_forward(x, weight, bias, force_pallas=True,
                               compute_dtype=jnp.float32)
    jax.block_until_ready(y_f32)
    assert y_f32.shape == (batch, output_dim)
    assert jnp.allclose(y_f32, y_ref, atol=2e-2, rtol=2e-2)

    # Default bf16 MXU path (v6e/v7x perf path), f32 accumulation.
    y_bf16 = maml_layer_forward(x, weight, bias, force_pallas=True)
    jax.block_until_ready(y_bf16)
    assert jnp.allclose(y_bf16, y_ref, atol=5e-2, rtol=5e-2)

    # ---- case 2: multi-tile grid (K accumulation directly into o_ref) ------
    b2, din2, dout2 = 48, 256, 256
    x2 = jax.random.normal(k3, (b2, din2), jnp.float32)
    w2, bvec2 = init_maml_layer_params(k4, din2, dout2)
    y2 = maml_layer_forward(x2, w2, bvec2, force_pallas=True,
                            compute_dtype=jnp.float32,
                            tm=16, tn=128, tk=128)       # grid = (3, 2, 2)
    jax.block_until_ready(y2)
    y2_ref = jnp.einsum("bk,ok->bo", x2, w2,
                        precision=lax.Precision.HIGHEST) + bvec2
    assert y2.shape == (b2, dout2)
    assert jnp.allclose(y2, y2_ref, atol=2e-2, rtol=2e-2)

    # ---- case 3: small batch, wide output (exercises v7x N-axis split) -----
    b3, din3, dout3 = 8, 512, 512
    x3 = jax.random.normal(k5, (b3, din3), jnp.float32)
    w3, bvec3 = init_maml_layer_params(k6, din3, dout3)
    y3 = maml_layer_forward(x3, w3, bvec3, force_pallas=True)   # grid = (1, 2, 1)
    jax.block_until_ready(y3)
    y3_ref = jnp.einsum("bk,ok->bo", x3, w3,
                        precision=lax.Precision.HIGHEST) + bvec3
    assert y3.shape == (b3, dout3)
    assert jnp.allclose(y3, y3_ref, atol=5e-2, rtol=5e-2)

    print("KERNEL_OK")
</pallas_src>

<mosaic_0001>
module attributes {stable_mosaic.version = 11 : i64} {
  func.func @_linear_kernel_fused_out(%arg0: i32, %arg1: i32, %arg2: i32, %arg3: memref<8x128xf32, #tpu.memory_space<vmem>>, %arg4: memref<128x128xf32, #tpu.memory_space<vmem>>, %arg5: memref<1x128xf32, #tpu.memory_space<vmem>>, %arg6: memref<8x128xf32, #tpu.memory_space<vmem>>) attributes {dimension_semantics = [#tpu.dimension_semantics<parallel>, #tpu.dimension_semantics<parallel>, #tpu.dimension_semantics<arbitrary>], iteration_bounds = array<i64: 1, 1, 1>, scalar_prefetch = 0 : i64, scratch_operands = 0 : i64, tpu.core_type = #tpu.core_type<tc>, window_params = [{transform_indices = @transform_0, window_bounds = array<i64: 8, 128>}, {transform_indices = @transform_1, window_bounds = array<i64: 128, 128>}, {transform_indices = @transform_2, window_bounds = array<i64: 1, 128>}, {transform_indices = @transform_3, window_bounds = array<i64: 8, 128>}]} {
    %c0_i32 = arith.constant 0 : i32
    %0 = arith.cmpi eq, %arg2, %c0_i32 : i32
    %1 = arith.extui %0 : i1 to i32
    %c0_i32_0 = arith.constant 0 : i32
    %2 = arith.cmpi ne, %1, %c0_i32_0 : i32
    scf.if %2 {
      %c0_8 = arith.constant 0 : index
      %c0_9 = arith.constant 0 : index
      %9 = vector.load %arg5[%c0_8, %c0_9] : memref<1x128xf32, #tpu.memory_space<vmem>>, vector<1x128xf32>
      %10 = vector.shape_cast %9 : vector<1x128xf32> to vector<1x128xf32>
      %11 = vector.broadcast %10 : vector<1x128xf32> to vector<8x128xf32>
      %c0_10 = arith.constant 0 : index
      %c0_11 = arith.constant 0 : index
      %12 = vector.load %arg6[%c0_10, %c0_11] : memref<8x128xf32, #tpu.memory_space<vmem>>, vector<8x128xf32>
      tpu.vector_store %arg6[%c0_10, %c0_11], %11 {strides = array<i32>} : memref<8x128xf32, #tpu.memory_space<vmem>>, vector<8x128xf32>,
    } else {
    }
    %c0 = arith.constant 0 : index
    %c0_1 = arith.constant 0 : index
    %3 = vector.load %arg6[%c0, %c0_1] : memref<8x128xf32, #tpu.memory_space<vmem>>, vector<8x128xf32>
    %c0_2 = arith.constant 0 : index
    %c0_3 = arith.constant 0 : index
    %4 = vector.load %arg3[%c0_2, %c0_3] : memref<8x128xf32, #tpu.memory_space<vmem>>, vector<8x128xf32>
    %c0_4 = arith.constant 0 : index
    %c0_5 = arith.constant 0 : index
    %5 = vector.load %arg4[%c0_4, %c0_5] : memref<128x128xf32, #tpu.memory_space<vmem>>, vector<128x128xf32>
    %cst = arith.constant dense<0.000000e+00> : vector<8x128xf32>
    %6 = tpu.matmul %4, %5, %cst {dimension_numbers = #tpu.dot_dimension_numbers<[1], [1], [0], [0], [0, 0, 1, 0], [], []>} : vector<8x128xf32>, vector<128x128xf32>, vector<8x128xf32> -> vector<8x128xf32>
    %7 = arith.addf %3, %6 : vector<8x128xf32>
    %c0_6 = arith.constant 0 : index
    %c0_7 = arith.constant 0 : index
    %8 = vector.load %arg6[%c0_6, %c0_7] : memref<8x128xf32, #tpu.memory_space<vmem>>, vector<8x128xf32>
    tpu.vector_store %arg6[%c0_6, %c0_7], %7 {strides = array<i32>} : memref<8x128xf32, #tpu.memory_space<vmem>>, vector<8x128xf32>,
    return
  }
  func.func @transform_0(%arg0: i32, %arg1: i32, %arg2: i32) -> (i32, i32) {
    %c0_i32 = arith.constant 0 : i32
    return %arg0, %arg2 : i32, i32
  }
  func.func @transform_1(%arg0: i32, %arg1: i32, %arg2: i32) -> (i32, i32) {
    %c0_i32 = arith.constant 0 : i32
    return %arg1, %arg2 : i32, i32
  }
  func.func @transform_2(%arg0: i32, %arg1: i32, %arg2: i32) -> (i32, i32) {
    %c0_i32 = arith.constant 0 : i32
    %c0_i32_0 = arith.constant 0 : i32
    return %c0_i32, %arg1 : i32, i32
  }
  func.func @transform_3(%arg0: i32, %arg1: i32, %arg2: i32) -> (i32, i32) {
    %c0_i32 = arith.constant 0 : i32
    return %arg0, %arg1 : i32, i32
  }
}

</mosaic_0001>

<llo_original>
// kernel: tpu_custom_call.1
$region0: #{tpu_custom_call.1}
  #allocation0 [shape = 'u32[]', space=smem, size = 0x4, offset = 0x4, fixed_abs, tag = 'smem constant byte address 0x4 - core index']
  #allocation1 [shape = 'u32[144,128]{1,0:T(1,128)}', space=vmem, size = 0x12000, scoped, tag = 'internal scratch']
  %s0 = inlined_call_operand.hbm [shape: f32[8,128], index: 0, kind: input, shape index: {}]
  %s1 = inlined_call_operand.hbm [shape: f32[128,128], index: 1, kind: input, shape index: {}]
  %s2 = inlined_call_operand.vmem [shape: f32[1,128], index: 2, kind: input, shape index: {}]
  %s3 = inlined_call_operand.hbm [shape: f32[8,128], index: 3, kind: output, shape index: {}]
  %s4 = sld [smem:[#allocation0]]
  $region34: #{tpu_custom_call.1} parent=0
    _
  %s6 = ssub.s32 1, %s4
  %s7 = scalar_select 0, %s6, %s4
  $region1: #{tpu_custom_call.1} parent=0
    #allocation2 [shape = 'u8[4096]{0}', space=vmem, size = 0x1000, scoped, tag = 'input window, operand 0, single buffered']
    #allocation3 [shape = 's32[1]{0}', space=sflag, size = 0x4, scoped, tag = 'scoped memory for tpu_custom_call.1']
    #allocation4 [shape = 's32[1]{0}', space=sflag, size = 0x4, scoped, tag = 'scoped memory for tpu_custom_call.1']
    #allocation5 [shape = 'u8[65536]{0}', space=vmem, size = 0x10000, scoped, tag = 'input window, operand 1, single buffered']
    #allocation6 [shape = 's32[1]{0}', space=sflag, size = 0x4, scoped, tag = 'scoped memory for tpu_custom_call.1']
    #allocation7 [shape = 'u8[4096]{0}', space=vmem, size = 0x1000, scoped, tag = 'output window, operand 0, single buffered']
    %8 = vsyncpa [#allocation3], 0
    %9 = vsyncpa [#allocation6], 0
    %10 = vsyncpa [#allocation4], 0
    // Predicated region
    $region2: #{tpu_custom_call.1} parent=1 // pred_check
      _
    $region3: #{tpu_custom_call.1} parent=1 // pred_check_branch
      %12 = sbr.rel (0) target = $region5
    $region4: #{tpu_custom_call.1} parent=1 // pred_region
      %s14 = ssub.s32 128, 128
      %15 = vsyncadd [#allocation3], %s14
      %s17 = sshll.u32 [#allocation2], 4
      %s18 = int_to_ptr.vmem [resolvable:$true] %s17
      %20 = dma.hbm_to_vmem [thread:$0]  %s0, 128, %s18, [#allocation3]
    $region5: #{tpu_custom_call.1} parent=1 // pred_fallthru
      _
    // Predicated region
    $region6: #{tpu_custom_call.1} parent=1 // pred_check
      _
    $region7: #{tpu_custom_call.1} parent=1 // pred_check_branch
      %22 = sbr.rel (0) target = $region9
    $region8: #{tpu_custom_call.1} parent=1 // pred_region
      %s24 = ssub.s32 2048, 2048
      %25 = vsyncadd [#allocation6], %s24
      %s26 = sshll.u32 [#allocation5], 4
      %s27 = int_to_ptr.vmem [resolvable:$true] %s26
      %32 = dma.hbm_to_vmem [thread:$0]  %s1, 2048, %s27, [#allocation6], 128, 128, 8
    $region9: #{tpu_custom_call.1} parent=1 // pred_fallthru
      _
    // Predicated region
    $region10: #{tpu_custom_call.1} parent=1 // pred_check
      _
    $region11: #{tpu_custom_call.1} parent=1 // pred_check_branch
      %34 = sbr.rel (0) target = $region13
    $region12: #{tpu_custom_call.1} parent=1 // pred_region
      _
    $region13: #{tpu_custom_call.1} parent=1 // pred_fallthru
      _
    // Predicated region
    $region14: #{tpu_custom_call.1} parent=1 // pred_check
      _
    $region15: #{tpu_custom_call.1} parent=1 // pred_check_branch
      %36 = sbr.rel (0) target = $region17
    $region16: #{tpu_custom_call.1} parent=1 // pred_region
      %37 = dma.done [#allocation3], 128
    $region17: #{tpu_custom_call.1} parent=1 // pred_fallthru
      _
    // Predicated region
    $region18: #{tpu_custom_call.1} parent=1 // pred_check
      _
    $region19: #{tpu_custom_call.1} parent=1 // pred_check_branch
      %39 = sbr.rel (0) target = $region21
    $region20: #{tpu_custom_call.1} parent=1 // pred_region
      %40 = dma.done [#allocation6], 2048
    $region21: #{tpu_custom_call.1} parent=1 // pred_fallthru
      _
    %p41 = scmp.eq.s32.totalorder 0, 0
    // Predicated region
    $region22: #{tpu_custom_call.1} parent=1 // pred_check
      %p42 = pneg %p41
    $region23: #{tpu_custom_call.1} parent=1 // pred_check_branch
      %44 = sbr.rel (%p42) target = $region25
    $region24: #{tpu_custom_call.1} parent=1 // pred_region
      %v45 = vld [vmem:[%s2] sm:$0x1]
      %v47 = vlaneseq
      %v48 = vshrl.u32 %v47, 7
      %v49 = vsub.s32 0, %v48
      %v50 = vrot.slane %v45, %v49
      %52 = vst [vmem:[#allocation7] sm:$0xff] %v50
    $region25: #{tpu_custom_call.1} parent=1 // pred_fallthru
      _
    %v53 = vld [vmem:[#allocation7] sm:$0xff]
    %v54 = vld [vmem:[#allocation2] sm:$0xff]
    %v55 = vld [vmem:[#allocation5] sm:$0xff]
    %v56 = vld [vmem:[#allocation5 + $0x8] sm:$0xff]
    %v57 = vld [vmem:[#allocation5 + $0x10] sm:$0xff]
    %v58 = vld [vmem:[#allocation5 + $0x18] sm:$0xff]
    %v59 = vld [vmem:[#allocation5 + $0x20] sm:$0xff]
    %v60 = vld [vmem:[#allocation5 + $0x28] sm:$0xff]
    %v61 = vld [vmem:[#allocation5 + $0x30] sm:$0xff]
    %v62 = vld [vmem:[#allocation5 + $0x38] sm:$0xff]
    %v63 = vld [vmem:[#allocation5 + $0x40] sm:$0xff]
    %v64 = vld [vmem:[#allocation5 + $0x48] sm:$0xff]
    %v65 = vld [vmem:[#allocation5 + $0x50] sm:$0xff]
    %v66 = vld [vmem:[#allocation5 + $0x58] sm:$0xff]
    %v67 = vld [vmem:[#allocation5 + $0x60] sm:$0xff]
    %v68 = vld [vmem:[#allocation5 + $0x68] sm:$0xff]
    %v69 = vld [vmem:[#allocation5 + $0x70] sm:$0xff]
    %v70 = vld [vmem:[#allocation5 + $0x78] sm:$0xff]
    %71 = vmatprep.subr.mxu0 0.0
    %72 = vmatpush1.xpose.msra.mxu0 %v70
    %73 = vmatprep.subr.mxu0 0.0
    %74 = vmatpush1.xpose.msra.mxu0 %v69
    %75 = vmatprep.subr.mxu0 0.0
    %76 = vmatpush1.xpose.msra.mxu0 %v68
    %77 = vmatprep.subr.mxu0 0.0
    %78 = vmatpush1.xpose.msra.mxu0 %v67
    %79 = vmatprep.subr.mxu0 0.0
    %80 = vmatpush1.xpose.msra.mxu0 %v66
    %81 = vmatprep.subr.mxu0 0.0
    %82 = vmatpush1.xpose.msra.mxu0 %v65
    %83 = vmatprep.subr.mxu0 0.0
    %84 = vmatpush1.xpose.msra.mxu0 %v64
    %85 = vmatprep.subr.mxu0 0.0
    %86 = vmatpush1.xpose.msra.mxu0 %v63
    %87 = vmatprep.subr.mxu0 0.0
    %88 = vmatpush1.xpose.msra.mxu0 %v62
    %89 = vmatprep.subr.mxu0 0.0
    %90 = vmatpush1.xpose.msra.mxu0 %v61
    %91 = vmatprep.subr.mxu0 0.0
    %92 = vmatpush1.xpose.msra.mxu0 %v60
    %93 = vmatprep.subr.mxu0 0.0
    %94 = vmatpush1.xpose.msra.mxu0 %v59
    %95 = vmatprep.subr.mxu0 0.0
    %96 = vmatpush1.xpose.msra.mxu0 %v58
    %97 = vmatprep.subr.mxu0 0.0
    %98 = vmatpush1.xpose.msra.mxu0 %v57
    %99 = vmatprep.subr.mxu0 0.0
    %100 = vmatpush1.xpose.msra.mxu0 %v56
    %101 = vmatprep.subr.mxu0 0.0
    %102 = vmatpush1.xpose.msra.mxu0 %v55
    %103 = vmatprep.subr.mxu0 0.0
    %104 = vmatpush2.xpose.msra.mxu0 0.0
    %105 = vmatprep.subr.mxu0 0.0
    %106 = vmatpush2.xpose.msra.mxu0 0.0
    %107 = vmatprep.subr.mxu0 0.0
    %108 = vmatpush2.xpose.msra.mxu0 0.0
    %109 = vmatprep.subr.mxu0 0.0
    %110 = vmatpush2.xpose.msra.mxu0 0.0
    %111 = vmatprep.subr.mxu0 0.0
    %112 = vmatpush2.xpose.msra.mxu0 0.0
    %113 = vmatprep.subr.mxu0 0.0
    %114 = vmatpush2.xpose.msra.mxu0 0.0
    %115 = vmatprep.subr.mxu0 0.0
    %116 = vmatpush2.xpose.msra.mxu0 0.0
    %117 = vmatprep.subr.mxu0 0.0
    %118 = vmatpush2.xpose.msra.mxu0 0.0
    %119 = vmatprep.subr.mxu0 0.0
    %120 = vmatpush2.xpose.msra.mxu0 0.0
    %121 = vmatprep.subr.mxu0 0.0
    %122 = vmatpush2.xpose.msra.mxu0 0.0
    %123 = vmatprep.subr.mxu0 0.0
    %124 = vmatpush2.xpose.msra.mxu0 0.0
    %125 = vmatprep.subr.mxu0 0.0
    %126 = vmatpush2.xpose.msra.mxu0 0.0
    %127 = vmatprep.subr.mxu0 0.0
    %128 = vmatpush2.xpose.msra.mxu0 0.0
    %129 = vmatprep.subr.mxu0 0.0
    %130 = vmatpush2.xpose.msra.mxu0 0.0
    %131 = vmatprep.subr.mxu0 0.0
    %132 = vmatpush2.xpose.msra.mxu0 0.0
    %133 = vmatprep.subr.mxu0 0.0
    %134 = vmatpush2.xpose.msra.mxu0 0.0
    %135 = vmatprep.mubr.f32.mxu0 0.0
    %136 = vmatmul.mubr.f32.gmra.mxu0 %v54
    %v137 = vpop.f32.mrf.mxu0
    %v138 = vadd.f32 0.0, %v137
    %v139 = vpop.f32.mrf.mxu0
    %140 = vdwg.mxu0
    %v141 = vadd.f32 %v53, %v138
    %142 = vst [vmem:[#allocation7] sm:$0xff] %v141
    // Predicated region
    $region26: #{tpu_custom_call.1} parent=1 // pred_check
      _
    $region27: #{tpu_custom_call.1} parent=1 // pred_check_branch
      %144 = sbr.rel (0) target = $region29
    $region28: #{tpu_custom_call.1} parent=1 // pred_region
      %s146 = ssub.s32 128, 128
      %147 = vsyncadd [#allocation4], %s146
      %s149 = sshll.u32 [#allocation7], 4
      %s150 = int_to_ptr.vmem [resolvable:$true] %s149
      %152 = dma.vmem_to_hbm [thread:$0]  %s150, 128, %s3, [#allocation4]
    $region29: #{tpu_custom_call.1} parent=1 // pred_fallthru
      _
    // Predicated region
    $region30: #{tpu_custom_call.1} parent=1 // pred_check
      _
    $region31: #{tpu_custom_call.1} parent=1 // pred_check_branch
      %154 = sbr.rel (0) target = $region33
    $region32: #{tpu_custom_call.1} parent=1 // pred_region
      %155 = dma.done [#allocation4], 128
    $region33: #{tpu_custom_call.1} parent=1 // pred_fallthru
      _
    %156 = vsyncpa [#allocation3], 1
    %157 = vsyncpa [#allocation6], 1
    %158 = vsyncpa [#allocation4], 1

</llo_original>
